<compile_context>
chip_gen: v6e
topology: v6e:2x2x1
jax: 0.10.0
libtpu: 0.0.40
codegen_flags: <defaults>
</compile_context>

<pallas_src>
import numpy as np
import jax
import jax.numpy as jnp
from jax.experimental import pallas as pl
from jax.experimental.pallas import tpu as pltpu


B_TILE_MAX = 1024  # lanes per grid step; h1/h2 are [32, b_tile] f32 = b_tile/32 vregs each


def critic_kernel(xT_ref, w1_ref, b1_ref, w2_ref, b2_ref, w3_ref, b3_ref, o_ref):
    xT = xT_ref[...]                                                   # [K, Bt] batch on lanes

    # fc1: [H, K] @ [K, Bt] on the MXU (K=4 is padded by Mosaic; MXU slot is idle anyway).
    h1 = jnp.dot(w1_ref[...], xT, preferred_element_type=jnp.float32) + b1_ref[...]
    h1 = jnp.maximum(h1, 0.0)                                          # [H, Bt]

    # fc2: [H, H] @ [H, Bt] on the MXU with f32 accumulation.
    h2 = jnp.dot(w2_ref[...], h1, preferred_element_type=jnp.float32) + b2_ref[...]
    h2 = jnp.maximum(h2, 0.0)                                          # [H, Bt]

    # fc3: [1, H] @ [H, Bt] on the MXU; scalar bias from SMEM broadcasts along lanes.
    v = jnp.dot(w3_ref[...], h2, preferred_element_type=jnp.float32) + b3_ref[0]
    o_ref[...] = v.astype(o_ref.dtype)                                 # lane-dense [1, Bt]


def _round_up(x, m):
    return ((x + m - 1) // m) * m


def _cdiv(a, b):
    return -(-a // b)


def _choose_tiling(B):
    """Return (b_tile, B_pad).

    Priorities: (1) pad B only to the next 128-lane multiple, (2) split into >=2
    tiles when it costs no extra padding (lets v7x shard the 'parallel' axis over
    both TensorCores; harmless elsewhere), (3) when B_pad > B_TILE_MAX use
    near-equal 128-multiple tiles minimizing the padded total.
    """
    Bp = _round_up(max(B, 1), 128)
    if Bp > B_TILE_MAX:
        n0 = _cdiv(Bp, B_TILE_MAX)
        best_tile, best_total = None, None
        for n in range(n0, n0 + 4):
            tile = _round_up(_cdiv(Bp, n), 128)
            if tile > B_TILE_MAX:
                continue
            total = n * tile
            if best_total is None or total < best_total:
                best_tile, best_total = tile, total
        return best_tile, best_total
    if Bp >= 256 and (Bp // 2) % 128 == 0:
        return Bp // 2, Bp          # free 2-way split: no extra padding
    return Bp, Bp                   # single tile, minimal padding


@jax.jit
def critic_forward(x, params):
    """x: [B, num_inputs] float32 -> [B, 1] float32 (same math as the PyTorch Critic)."""
    w1, b1, w2, b2, w3, b3 = params        # PyTorch layouts: w [out, in], b [out]
    B, K = x.shape
    H = w1.shape[0]

    if B == 0:                              # guard degenerate batch (grid would be empty)
        return jnp.zeros((0, 1), jnp.float32)

    b_tile, B_pad = _choose_tiling(B)

    # Batch on the lane axis; pad to the chosen lane-multiple. Fuses under jit.
    xT = jnp.pad(x.astype(jnp.float32).T, ((0, 0), (0, B_pad - B)))    # [K, B_pad]

    b1c = b1.reshape(H, 1).astype(jnp.float32)   # lane-broadcast columns
    b2c = b2.reshape(H, 1).astype(jnp.float32)
    w3r = w3.reshape(1, H).astype(jnp.float32)   # PyTorch-native [1, H] row
    b3s = b3.reshape(1).astype(jnp.float32)      # scalar, lives in SMEM

    grid = (B_pad // b_tile,)
    out = pl.pallas_call(
        critic_kernel,
        out_shape=jax.ShapeDtypeStruct((1, B_pad), jnp.float32),
        grid=grid,
        in_specs=[
            pl.BlockSpec((K, b_tile), lambda i: (0, i)),   # x^T batch tile
            pl.BlockSpec((H, K), lambda i: (0, 0)),        # w1 resident
            pl.BlockSpec((H, 1), lambda i: (0, 0)),        # b1 resident
            pl.BlockSpec((H, H), lambda i: (0, 0)),        # w2 resident
            pl.BlockSpec((H, 1), lambda i: (0, 0)),        # b2 resident
            pl.BlockSpec((1, H), lambda i: (0, 0)),        # w3 resident
            pl.BlockSpec((1,), lambda i: (0,),
                         memory_space=pltpu.MemorySpace.SMEM),  # b3 scalar
        ],
        out_specs=pl.BlockSpec((1, b_tile), lambda i: (0, i)),  # lane-dense [1, Bt]
        compiler_params=pltpu.CompilerParams(
            dimension_semantics=("parallel",)),  # lets v7x split batch tiles over 2 TCs
    )(xT, w1.astype(jnp.float32), b1c, w2.astype(jnp.float32), b2c, w3r, b3s)

    return out[0, :B].reshape(B, 1)


# ----------------------------- init / reference -----------------------------

def xavier_uniform(key, out_features, in_features, gain):
    # Matches torch.nn.init.xavier_uniform_ on a [out, in] weight.
    bound = gain * np.sqrt(6.0 / (in_features + out_features))
    return jax.random.uniform(
        key, (out_features, in_features), dtype=jnp.float32, minval=-bound, maxval=bound
    )


def init_critic_params(key, num_inputs, num_hidden):
    k1, k2, k3 = jax.random.split(key, 3)
    g = np.sqrt(2.0)
    w1 = xavier_uniform(k1, num_hidden, num_inputs, g)
    b1 = jnp.full((num_hidden,), 0.01, dtype=jnp.float32)
    w2 = xavier_uniform(k2, num_hidden, num_hidden, g)
    b2 = jnp.full((num_hidden,), 0.01, dtype=jnp.float32)
    w3 = xavier_uniform(k3, 1, num_hidden, 1.0)
    b3 = jnp.full((1,), 0.01, dtype=jnp.float32)
    return (w1, b1, w2, b2, w3, b3)


def critic_ref(x, params):
    w1, b1, w2, b2, w3, b3 = params
    h1 = jnp.maximum(x @ w1.T + b1, 0.0)
    h2 = jnp.maximum(h1 @ w2.T + b2, 0.0)
    return h2 @ w3.T + b3


# TODO(synk): for the actor-critic rollout loop, fuse the actor MLP into this same
# pallas_call (shared xT input block, second output ref) and/or batch multiple env
# timesteps per call — at B=8 launch + DMA fixed overhead dominates.

if __name__ == "__main__":
    num_inputs, num_hidden, batch = 4, 32, 8  # CartPole obs dim = 4
    key = jax.random.PRNGKey(0)
    kx, kp = jax.random.split(key)
    x = jax.random.normal(kx, (batch, num_inputs), dtype=jnp.float32)
    params = init_critic_params(kp, num_inputs, num_hidden)

    v = critic_forward(x, params)
    jax.block_until_ready(v)
    assert v.shape == (batch, 1)
    np.testing.assert_allclose(
        np.asarray(v), np.asarray(critic_ref(x, params)), rtol=1e-5, atol=1e-5
    )

    # Minimal-padding single-tile path (B=600 -> one 640-lane tile, 40 padded lanes).
    x_600 = jax.random.normal(jax.random.PRNGKey(1), (600, num_inputs), dtype=jnp.float32)
    v_600 = critic_forward(x_600, params)
    jax.block_until_ready(v_600)
    np.testing.assert_allclose(
        np.asarray(v_600), np.asarray(critic_ref(x_600, params)), rtol=1e-5, atol=1e-5
    )

    # Free 2-way split path (B=256 -> grid=(2,), 128-lane tiles, zero padding).
    x_256 = jax.random.normal(jax.random.PRNGKey(2), (256, num_inputs), dtype=jnp.float32)
    v_256 = critic_forward(x_256, params)
    jax.block_until_ready(v_256)
    np.testing.assert_allclose(
        np.asarray(v_256), np.asarray(critic_ref(x_256, params)), rtol=1e-5, atol=1e-5
    )

    # Degenerate-batch guard.
    v_empty = critic_forward(jnp.zeros((0, num_inputs), jnp.float32), params)
    jax.block_until_ready(v_empty)
    assert v_empty.shape == (0, 1)

    print("KERNEL_OK")
</pallas_src>

<mosaic_0001>
module attributes {stable_mosaic.version = 11 : i64} {
  func.func @critic_kernel(%arg0: i32, %arg1: memref<4x128xf32, #tpu.memory_space<vmem>>, %arg2: memref<32x4xf32, #tpu.memory_space<vmem>>, %arg3: memref<32x1xf32, #tpu.memory_space<vmem>>, %arg4: memref<32x32xf32, #tpu.memory_space<vmem>>, %arg5: memref<32x1xf32, #tpu.memory_space<vmem>>, %arg6: memref<1x32xf32, #tpu.memory_space<vmem>>, %arg7: memref<1xf32, #tpu.memory_space<smem>>, %arg8: memref<1x128xf32, #tpu.memory_space<vmem>>) attributes {dimension_semantics = [#tpu.dimension_semantics<parallel>], iteration_bounds = array<i64: 1>, scalar_prefetch = 0 : i64, scratch_operands = 0 : i64, tpu.core_type = #tpu.core_type<tc>, window_params = [{transform_indices = @transform_0, window_bounds = array<i64: 4, 128>}, {pipeline_mode = #tpu.pipeline_mode<synchronous>, transform_indices = @transform_1, window_bounds = array<i64: 32, 4>}, {pipeline_mode = #tpu.pipeline_mode<synchronous>, transform_indices = @transform_2, window_bounds = array<i64: 32, 1>}, {pipeline_mode = #tpu.pipeline_mode<synchronous>, transform_indices = @transform_3, window_bounds = array<i64: 32, 32>}, {pipeline_mode = #tpu.pipeline_mode<synchronous>, transform_indices = @transform_4, window_bounds = array<i64: 32, 1>}, {pipeline_mode = #tpu.pipeline_mode<synchronous>, transform_indices = @transform_5, window_bounds = array<i64: 1, 32>}, {transform_indices = @transform_6, window_bounds = array<i64: 1>}, {transform_indices = @transform_7, window_bounds = array<i64: 1, 128>}]} {
    %c0 = arith.constant 0 : index
    %c0_0 = arith.constant 0 : index
    %0 = vector.load %arg1[%c0, %c0_0] : memref<4x128xf32, #tpu.memory_space<vmem>>, vector<4x128xf32>
    %c0_1 = arith.constant 0 : index
    %c0_2 = arith.constant 0 : index
    %1 = vector.load %arg2[%c0_1, %c0_2] : memref<32x4xf32, #tpu.memory_space<vmem>>, vector<32x4xf32>
    %cst = arith.constant dense<0.000000e+00> : vector<32x128xf32>
    %2 = tpu.matmul %1, %0, %cst {dimension_numbers = #tpu.dot_dimension_numbers<[1], [0], [0], [1], [0, 0, 1, 1], [], []>} : vector<32x4xf32>, vector<4x128xf32>, vector<32x128xf32> -> vector<32x128xf32>
    %c0_3 = arith.constant 0 : index
    %c0_4 = arith.constant 0 : index
    %3 = vector.load %arg3[%c0_3, %c0_4] : memref<32x1xf32, #tpu.memory_space<vmem>>, vector<32x1xf32>
    %4 = vector.broadcast %3 : vector<32x1xf32> to vector<32x128xf32>
    %5 = arith.addf %2, %4 : vector<32x128xf32>
    %cst_5 = arith.constant 0.000000e+00 : f32
    %6 = vector.broadcast %cst_5 : f32 to vector<32x128xf32>
    %7 = arith.maximumf %5, %6 : vector<32x128xf32>
    %c0_6 = arith.constant 0 : index
    %c0_7 = arith.constant 0 : index
    %8 = vector.load %arg4[%c0_6, %c0_7] : memref<32x32xf32, #tpu.memory_space<vmem>>, vector<32x32xf32>
    %cst_8 = arith.constant dense<0.000000e+00> : vector<32x128xf32>
    %9 = tpu.matmul %8, %7, %cst_8 {dimension_numbers = #tpu.dot_dimension_numbers<[1], [0], [0], [1], [0, 0, 1, 1], [], []>} : vector<32x32xf32>, vector<32x128xf32>, vector<32x128xf32> -> vector<32x128xf32>
    %c0_9 = arith.constant 0 : index
    %c0_10 = arith.constant 0 : index
    %10 = vector.load %arg5[%c0_9, %c0_10] : memref<32x1xf32, #tpu.memory_space<vmem>>, vector<32x1xf32>
    %11 = vector.broadcast %10 : vector<32x1xf32> to vector<32x128xf32>
    %12 = arith.addf %9, %11 : vector<32x128xf32>
    %cst_11 = arith.constant 0.000000e+00 : f32
    %13 = vector.broadcast %cst_11 : f32 to vector<32x128xf32>
    %14 = arith.maximumf %12, %13 : vector<32x128xf32>
    %c0_12 = arith.constant 0 : index
    %c0_13 = arith.constant 0 : index
    %15 = vector.load %arg6[%c0_12, %c0_13] : memref<1x32xf32, #tpu.memory_space<vmem>>, vector<1x32xf32>
    %cst_14 = arith.constant dense<0.000000e+00> : vector<1x128xf32>
    %16 = tpu.matmul %15, %14, %cst_14 {dimension_numbers = #tpu.dot_dimension_numbers<[1], [0], [0], [1], [0, 0, 1, 1], [], []>} : vector<1x32xf32>, vector<32x128xf32>, vector<1x128xf32> -> vector<1x128xf32>
    %c0_15 = arith.constant 0 : index
    %17 = memref.load %arg7[%c0_15] : memref<1xf32, #tpu.memory_space<smem>>
    %18 = vector.broadcast %17 : f32 to vector<1x128xf32>
    %19 = arith.addf %16, %18 : vector<1x128xf32>
    %c0_16 = arith.constant 0 : index
    %c0_17 = arith.constant 0 : index
    %20 = vector.load %arg8[%c0_16, %c0_17] : memref<1x128xf32, #tpu.memory_space<vmem>>, vector<1x128xf32>
    tpu.vector_store %arg8[%c0_16, %c0_17], %19 {strides = array<i32>} : memref<1x128xf32, #tpu.memory_space<vmem>>, vector<1x128xf32>,
    return
  }
  func.func @transform_0(%arg0: i32) -> (i32, i32) {
    %c0_i32 = arith.constant 0 : i32
    %c0_i32_0 = arith.constant 0 : i32
    return %c0_i32, %arg0 : i32, i32
  }
  func.func @transform_1(%arg0: i32) -> (i32, i32) {
    %c0_i32 = arith.constant 0 : i32
    %c0_i32_0 = arith.constant 0 : i32
    %c0_i32_1 = arith.constant 0 : i32
    return %c0_i32, %c0_i32_0 : i32, i32
  }
  func.func @transform_2(%arg0: i32) -> (i32, i32) {
    %c0_i32 = arith.constant 0 : i32
    %c0_i32_0 = arith.constant 0 : i32
    %c0_i32_1 = arith.constant 0 : i32
    return %c0_i32, %c0_i32_0 : i32, i32
  }
  func.func @transform_3(%arg0: i32) -> (i32, i32) {
    %c0_i32 = arith.constant 0 : i32
    %c0_i32_0 = arith.constant 0 : i32
    %c0_i32_1 = arith.constant 0 : i32
    return %c0_i32, %c0_i32_0 : i32, i32
  }
  func.func @transform_4(%arg0: i32) -> (i32, i32) {
    %c0_i32 = arith.constant 0 : i32
    %c0_i32_0 = arith.constant 0 : i32
    %c0_i32_1 = arith.constant 0 : i32
    return %c0_i32, %c0_i32_0 : i32, i32
  }
  func.func @transform_5(%arg0: i32) -> (i32, i32) {
    %c0_i32 = arith.constant 0 : i32
    %c0_i32_0 = arith.constant 0 : i32
    %c0_i32_1 = arith.constant 0 : i32
    return %c0_i32, %c0_i32_0 : i32, i32
  }
  func.func @transform_6(%arg0: i32) -> i32 {
    %c0_i32 = arith.constant 0 : i32
    %c0_i32_0 = arith.constant 0 : i32
    return %c0_i32 : i32
  }
  func.func @transform_7(%arg0: i32) -> (i32, i32) {
    %c0_i32 = arith.constant 0 : i32
    %c0_i32_0 = arith.constant 0 : i32
    return %c0_i32, %arg0 : i32, i32
  }
}

</mosaic_0001>

<llo_original>
// kernel: critic_forward.1
$region0: #{critic_forward.1}
  #allocation0 [shape = 'u32[]', space=smem, size = 0x4, offset = 0x4, fixed_abs, tag = 'smem constant byte address 0x4 - core index']
  #allocation1 [shape = 'u32[144,128]{1,0:T(1,128)}', space=vmem, size = 0x12000, scoped, tag = 'internal scratch']
  #allocation2 [shape = 'f32[1]{0:T(128)S(6)}', space=smem, size = 0x200, scoped, tag = 'scoped memory for critic_forward.1']
  %s0 = inlined_call_operand.vmem [shape: f32[4,128], index: 0, kind: input, shape index: {}]
  %s1 = inlined_call_operand.vmem [shape: f32[32,4], index: 1, kind: input, shape index: {}]
  %s2 = inlined_call_operand.vmem [shape: f32[32,1], index: 2, kind: input, shape index: {}]
  %s3 = inlined_call_operand.vmem [shape: f32[32,32], index: 3, kind: input, shape index: {}]
  %s4 = inlined_call_operand.vmem [shape: f32[32,1], index: 4, kind: input, shape index: {}]
  %s5 = inlined_call_operand.vmem [shape: f32[1,32], index: 5, kind: input, shape index: {}]
  %s6 = inlined_call_operand.<no memory space> [shape: f32[1], index: 6, kind: input, shape index: {}]
  %s7 = inlined_call_operand.vmem [shape: f32[1,128], index: 7, kind: output, shape index: {}]
  %s8 = sld [smem:[#allocation0]]
  $region38: #{critic_forward.1} parent=0
    _
  %s10 = ssub.s32 1, %s8
  %s11 = scalar_select 0, %s10, %s8
  %12 = sst [smem:[#allocation2]] %s6
  // Predicated region
  $region2: #{critic_forward.1} parent=0 // pred_check
    _
  $region3: #{critic_forward.1} parent=0 // pred_check_branch
    %14 = sbr.rel (0) target = $region5
  $region4: #{critic_forward.1} parent=0 // pred_region
    _
  $region5: #{critic_forward.1} parent=0 // pred_fallthru
    _
  // Predicated region
  $region6: #{critic_forward.1} parent=0 // pred_check
    _
  $region7: #{critic_forward.1} parent=0 // pred_check_branch
    %16 = sbr.rel (0) target = $region9
  $region8: #{critic_forward.1} parent=0 // pred_region
    _
  $region9: #{critic_forward.1} parent=0 // pred_fallthru
    _
  // Predicated region
  $region10: #{critic_forward.1} parent=0 // pred_check
    _
  $region11: #{critic_forward.1} parent=0 // pred_check_branch
    %18 = sbr.rel (0) target = $region13
  $region12: #{critic_forward.1} parent=0 // pred_region
    _
  $region13: #{critic_forward.1} parent=0 // pred_fallthru
    _
  // Predicated region
  $region14: #{critic_forward.1} parent=0 // pred_check
    _
  $region15: #{critic_forward.1} parent=0 // pred_check_branch
    %20 = sbr.rel (0) target = $region17
  $region16: #{critic_forward.1} parent=0 // pred_region
    _
  $region17: #{critic_forward.1} parent=0 // pred_fallthru
    _
  // Predicated region
  $region18: #{critic_forward.1} parent=0 // pred_check
    _
  $region19: #{critic_forward.1} parent=0 // pred_check_branch
    %22 = sbr.rel (0) target = $region21
  $region20: #{critic_forward.1} parent=0 // pred_region
    _
  $region21: #{critic_forward.1} parent=0 // pred_fallthru
    _
  // Predicated region
  $region22: #{critic_forward.1} parent=0 // pred_check
    _
  $region23: #{critic_forward.1} parent=0 // pred_check_branch
    %24 = sbr.rel (0) target = $region25
  $region24: #{critic_forward.1} parent=0 // pred_region
    _
  $region25: #{critic_forward.1} parent=0 // pred_fallthru
    _
  // Predicated region
  $region26: #{critic_forward.1} parent=0 // pred_check
    _
  $region27: #{critic_forward.1} parent=0 // pred_check_branch
    %26 = sbr.rel (0) target = $region29
  $region28: #{critic_forward.1} parent=0 // pred_region
    _
  $region29: #{critic_forward.1} parent=0 // pred_fallthru
    _
  %v27 = vld [vmem:[%s0] sm:$0xf]
  %v28 = vld [vmem:[%s1] sm:$0xff]
  %v29 = vld [vmem:[%s1 + $0x8] sm:$0xff]
  %v30 = vld [vmem:[%s1 + $0x10] sm:$0xff]
  %v31 = vld [vmem:[%s1 + $0x18] sm:$0xff]
  %v32 = vld [vmem:[%s2] sm:$0xff]
  %v33 = vld [vmem:[%s2 + $0x8] sm:$0xff]
  %v34 = vld [vmem:[%s2 + $0x10] sm:$0xff]
  %v35 = vld [vmem:[%s2 + $0x18] sm:$0xff]
  %37 = vset.pattern.permute.xlu0 0
  %38 = vperm.xlu0 %37, %v32
  %v39 = vpop.permute.xlu0 %38
  %42 = vset.pattern.permute.xlu0 0
  %43 = vperm.xlu0 %42, %v33
  %v44 = vpop.permute.xlu0 %43
  %47 = vset.pattern.permute.xlu0 0
  %48 = vperm.xlu0 %47, %v34
  %v49 = vpop.permute.xlu0 %48
  %52 = vset.pattern.permute.xlu0 0
  %53 = vperm.xlu0 %52, %v35
  %v54 = vpop.permute.xlu0 %53
  %vm56 = vcmask 31744
  %v58 = vsel %vm56, %v28, 0
  %v61 = vsel %vm56, %v29, 0
  %v64 = vsel %vm56, %v30, 0
  %v67 = vsel %vm56, %v31, 0
  %vm69 = vcmask 1043456
  %v71 = vsel %vm69, %v27, 0
  %73 = vmatprep.subr.mxu0 0.0
  %74 = vmatpush1.msra.mxu0 0.0
  %75 = vmatprep.subr.mxu0 0.0
  %76 = vmatpush1.msra.mxu0 0.0
  %77 = vmatprep.subr.mxu0 0.0
  %78 = vmatpush1.msra.mxu0 0.0
  %79 = vmatprep.subr.mxu0 0.0
  %80 = vmatpush1.msra.mxu0 0.0
  %81 = vmatprep.subr.mxu0 0.0
  %82 = vmatpush1.msra.mxu0 0.0
  %83 = vmatprep.subr.mxu0 0.0
  %84 = vmatpush1.msra.mxu0 0.0
  %85 = vmatprep.subr.mxu0 0.0
  %86 = vmatpush1.msra.mxu0 0.0
  %87 = vmatprep.subr.mxu0 0.0
  %88 = vmatpush1.msra.mxu0 0.0
  %89 = vmatprep.subr.mxu0 0.0
  %90 = vmatpush1.msra.mxu0 0.0
  %91 = vmatprep.subr.mxu0 0.0
  %92 = vmatpush1.msra.mxu0 0.0
  %93 = vmatprep.subr.mxu0 0.0
  %94 = vmatpush1.msra.mxu0 0.0
  %95 = vmatprep.subr.mxu0 0.0
  %96 = vmatpush1.msra.mxu0 0.0
  %97 = vmatprep.subr.mxu0 0.0
  %98 = vmatpush1.msra.mxu0 0.0
  %99 = vmatprep.subr.mxu0 0.0
  %100 = vmatpush1.msra.mxu0 0.0
  %101 = vmatprep.subr.mxu0 0.0
  %102 = vmatpush1.msra.mxu0 0.0
  %103 = vmatprep.subr.mxu0 0.0
  %104 = vmatpush1.msra.mxu0 %v71
  %105 = vmatprep.subr.mxu0 0.0
  %106 = vmatpush2.msra.mxu0 0.0
  %107 = vmatprep.subr.mxu0 0.0
  %108 = vmatpush2.msra.mxu0 0.0
  %109 = vmatprep.subr.mxu0 0.0
  %110 = vmatpush2.msra.mxu0 0.0
  %111 = vmatprep.subr.mxu0 0.0
  %112 = vmatpush2.msra.mxu0 0.0
  %113 = vmatprep.subr.mxu0 0.0
  %114 = vmatpush2.msra.mxu0 0.0
  %115 = vmatprep.subr.mxu0 0.0
  %116 = vmatpush2.msra.mxu0 0.0
  %117 = vmatprep.subr.mxu0 0.0
  %118 = vmatpush2.msra.mxu0 0.0
  %119 = vmatprep.subr.mxu0 0.0
  %120 = vmatpush2.msra.mxu0 0.0
  %121 = vmatprep.subr.mxu0 0.0
  %122 = vmatpush2.msra.mxu0 0.0
  %123 = vmatprep.subr.mxu0 0.0
  %124 = vmatpush2.msra.mxu0 0.0
  %125 = vmatprep.subr.mxu0 0.0
  %126 = vmatpush2.msra.mxu0 0.0
  %127 = vmatprep.subr.mxu0 0.0
  %128 = vmatpush2.msra.mxu0 0.0
  %129 = vmatprep.subr.mxu0 0.0
  %130 = vmatpush2.msra.mxu0 0.0
  %131 = vmatprep.subr.mxu0 0.0
  %132 = vmatpush2.msra.mxu0 0.0
  %133 = vmatprep.subr.mxu0 0.0
  %134 = vmatpush2.msra.mxu0 0.0
  %135 = vmatprep.subr.mxu0 0.0
  %136 = vmatpush2.msra.mxu0 0.0
  %137 = vmatprep.mubr.f32.mxu0 0.0
  %138 = vmatmul.mubr.f32.gmra.mxu0 %v58
  %v139 = vpop.f32.mrf.mxu0
  %v140 = vadd.f32 %v39, %v139
  %v141 = vpop.f32.mrf.mxu0
  %142 = vmatprep.mubr.f32.mxu0 0.0
  %143 = vmatmul.mubr.f32.gmra.mxu0 %v61
  %v144 = vpop.f32.mrf.mxu0
  %v145 = vadd.f32 %v44, %v144
  %v146 = vpop.f32.mrf.mxu0
  %147 = vmatprep.mubr.f32.mxu0 0.0
  %148 = vmatmul.mubr.f32.gmra.mxu0 %v64
  %v149 = vpop.f32.mrf.mxu0
  %v150 = vadd.f32 %v49, %v149
  %v151 = vpop.f32.mrf.mxu0
  %152 = vmatprep.mubr.f32.mxu0 0.0
  %153 = vmatmul.mubr.f32.gmra.mxu0 %v67
  %v154 = vpop.f32.mrf.mxu0
  %v155 = vadd.f32 %v54, %v154
  %v156 = vpop.f32.mrf.mxu0
  %157 = vdwg.mxu0
  %v158 = vmax.f32 %v140, 0.0
  %v159 = vmax.f32 %v145, 0.0
  %v160 = vmax.f32 %v150, 0.0
  %v161 = vmax.f32 %v155, 0.0
  %v162 = vld [vmem:[%s3] sm:$0xff]
  %v163 = vld [vmem:[%s3 + $0x8] sm:$0xff]
  %v164 = vld [vmem:[%s3 + $0x10] sm:$0xff]
  %v165 = vld [vmem:[%s3 + $0x18] sm:$0xff]
  %v166 = vld [vmem:[%s4] sm:$0xff]
  %v167 = vld [vmem:[%s4 + $0x8] sm:$0xff]
  %v168 = vld [vmem:[%s4 + $0x10] sm:$0xff]
  %v169 = vld [vmem:[%s4 + $0x18] sm:$0xff]
  %171 = vset.pattern.permute.xlu0 0
  %172 = vperm.xlu0 %171, %v166
  %v173 = vpop.permute.xlu0 %172
  %176 = vset.pattern.permute.xlu0 0
  %177 = vperm.xlu0 %176, %v167
  %v178 = vpop.permute.xlu0 %177
  %181 = vset.pattern.permute.xlu0 0
  %182 = vperm.xlu0 %181, %v168
  %v183 = vpop.permute.xlu0 %182
  %186 = vset.pattern.permute.xlu0 0
  %187 = vperm.xlu0 %186, %v169
  %v188 = vpop.permute.xlu0 %187
  %vm190 = vcmask 261120
  %v192 = vsel %vm190, %v162, 0
  %v195 = vsel %vm190, %v163, 0
  %v198 = vsel %vm190, %v164, 0
  %v201 = vsel %vm190, %v165, 0
  %203 = vmatprep.subr.mxu0 0.0
  %204 = vmatpush1.msra.mxu0 0.0
  %205 = vmatprep.subr.mxu0 0.0
  %206 = vmatpush1.msra.mxu0 0.0
  %207 = vmatprep.subr.mxu0 0.0
  %208 = vmatpush1.msra.mxu0 0.0
  %209 = vmatprep.subr.mxu0 0.0
  %210 = vmatpush1.msra.mxu0 0.0
  %211 = vmatprep.subr.mxu0 0.0
  %212 = vmatpush1.msra.mxu0 0.0
  %213 = vmatprep.subr.mxu0 0.0
  %214 = vmatpush1.msra.mxu0 0.0
  %215 = vmatprep.subr.mxu0 0.0
  %216 = vmatpush1.msra.mxu0 0.0
  %217 = vmatprep.subr.mxu0 0.0
  %218 = vmatpush1.msra.mxu0 0.0
  %219 = vmatprep.subr.mxu0 0.0
  %220 = vmatpush1.msra.mxu0 0.0
  %221 = vmatprep.subr.mxu0 0.0
  %222 = vmatpush1.msra.mxu0 0.0
  %223 = vmatprep.subr.mxu0 0.0
  %224 = vmatpush1.msra.mxu0 0.0
  %225 = vmatprep.subr.mxu0 0.0
  %226 = vmatpush1.msra.mxu0 0.0
  %227 = vmatprep.subr.mxu0 0.0
  %228 = vmatpush1.msra.mxu0 %v161
  %229 = vmatprep.subr.mxu0 0.0
  %230 = vmatpush1.msra.mxu0 %v160
  %231 = vmatprep.subr.mxu0 0.0
  %232 = vmatpush1.msra.mxu0 %v159
  %233 = vmatprep.subr.mxu0 0.0
  %234 = vmatpush1.msra.mxu0 %v158
  %235 = vmatprep.subr.mxu0 0.0
  %236 = vmatpush2.msra.mxu0 0.0
  %237 = vmatprep.subr.mxu0 0.0
  %238 = vmatpush2.msra.mxu0 0.0
  %239 = vmatprep.subr.mxu0 0.0
  %240 = vmatpush2.msra.mxu0 0.0
  %241 = vmatprep.subr.mxu0 0.0
  %242 = vmatpush2.msra.mxu0 0.0
  %243 = vmatprep.subr.mxu0 0.0
  %244 = vmatpush2.msra.mxu0 0.0
  %245 = vmatprep.subr.mxu0 0.0
  %246 = vmatpush2.msra.mxu0 0.0
  %247 = vmatprep.subr.mxu0 0.0
  %248 = vmatpush2.msra.mxu0 0.0
  %249 = vmatprep.subr.mxu0 0.0
  %250 = vmatpush2.msra.mxu0 0.0
  %251 = vmatprep.subr.mxu0 0.0
  %252 = vmatpush2.msra.mxu0 0.0
  %253 = vmatprep.subr.mxu0 0.0
  %254 = vmatpush2.msra.mxu0 0.0
  %255 = vmatprep.subr.mxu0 0.0
  %256 = vmatpush2.msra.mxu0 0.0
  %257 = vmatprep.subr.mxu0 0.0
  %258 = vmatpush2.msra.mxu0 0.0
  %259 = vmatprep.subr.mxu0 0.0
  %260 = vmatpush2.msra.mxu0 0.0
  %261 = vmatprep.subr.mxu0 0.0
  %262 = vmatpush2.msra.mxu0 0.0
  %263 = vmatprep.subr.mxu0 0.0
  %264 = vmatpush2.msra.mxu0 0.0
  %265 = vmatprep.subr.mxu0 0.0
  %266 = vmatpush2.msra.mxu0 0.0
  %267 = vmatprep.mubr.f32.mxu0 0.0
  %268 = vmatmul.mubr.f32.gmra.mxu0 %v192
  %v269 = vpop.f32.mrf.mxu0
  %v270 = vadd.f32 %v173, %v269
  %v271 = vpop.f32.mrf.mxu0
  %272 = vmatprep.mubr.f32.mxu0 0.0
  %273 = vmatmul.mubr.f32.gmra.mxu0 %v195
  %v274 = vpop.f32.mrf.mxu0
  %v275 = vadd.f32 %v178, %v274
  %v276 = vpop.f32.mrf.mxu0
  %277 = vmatprep.mubr.f32.mxu0 0.0
  %278 = vmatmul.mubr.f32.gmra.mxu0 %v198
  %v279 = vpop.f32.mrf.mxu0
  %v280 = vadd.f32 %v183, %v279
  %v281 = vpop.f32.mrf.mxu0
  %282 = vmatprep.mubr.f32.mxu0 0.0
  %283 = vmatmul.mubr.f32.gmra.mxu0 %v201
  %v284 = vpop.f32.mrf.mxu0
  %v285 = vadd.f32 %v188, %v284
  %v286 = vpop.f32.mrf.mxu0
  %287 = vdwg.mxu0
  %v288 = vmax.f32 %v270, 0.0
  %v289 = vmax.f32 %v275, 0.0
  %v290 = vmax.f32 %v280, 0.0
  %v291 = vmax.f32 %v285, 0.0
  %v292 = vld [vmem:[%s5] sm:$0x1]
  %s293 = sld [smem:[#allocation2]]
  %v294 = vstv %s293
  %v296 = vsel %vm190, %v292, 0
  %298 = vmatprep.subr.mxu0 0.0
  %299 = vmatpush1.msra.mxu0 0.0
  %300 = vmatprep.subr.mxu0 0.0
  %301 = vmatpush1.msra.mxu0 0.0
  %302 = vmatprep.subr.mxu0 0.0
  %303 = vmatpush1.msra.mxu0 0.0
  %304 = vmatprep.subr.mxu0 0.0
  %305 = vmatpush1.msra.mxu0 0.0
  %306 = vmatprep.subr.mxu0 0.0
  %307 = vmatpush1.msra.mxu0 0.0
  %308 = vmatprep.subr.mxu0 0.0
  %309 = vmatpush1.msra.mxu0 0.0
  %310 = vmatprep.subr.mxu0 0.0
  %311 = vmatpush1.msra.mxu0 0.0
  %312 = vmatprep.subr.mxu0 0.0
  %313 = vmatpush1.msra.mxu0 0.0
  %314 = vmatprep.subr.mxu0 0.0
  %315 = vmatpush1.msra.mxu0 0.0
  %316 = vmatprep.subr.mxu0 0.0
  %317 = vmatpush1.msra.mxu0 0.0
  %318 = vmatprep.subr.mxu0 0.0
  %319 = vmatpush1.msra.mxu0 0.0
  %320 = vmatprep.subr.mxu0 0.0
  %321 = vmatpush1.msra.mxu0 0.0
  %322 = vmatprep.subr.mxu0 0.0
  %323 = vmatpush1.msra.mxu0 %v291
  %324 = vmatprep.subr.mxu0 0.0
  %325 = vmatpush1.msra.mxu0 %v290
  %326 = vmatprep.subr.mxu0 0.0
  %327 = vmatpush1.msra.mxu0 %v289
  %328 = vmatprep.subr.mxu0 0.0
  %329 = vmatpush1.msra.mxu0 %v288
  %330 = vmatprep.subr.mxu0 0.0
  %331 = vmatpush2.msra.mxu0 0.0
  %332 = vmatprep.subr.mxu0 0.0
  %333 = vmatpush2.msra.mxu0 0.0
  %334 = vmatprep.subr.mxu0 0.0
  %335 = vmatpush2.msra.mxu0 0.0
  %336 = vmatprep.subr.mxu0 0.0
  %337 = vmatpush2.msra.mxu0 0.0
  %338 = vmatprep.subr.mxu0 0.0
  %339 = vmatpush2.msra.mxu0 0.0
  %340 = vmatprep.subr.mxu0 0.0
  %341 = vmatpush2.msra.mxu0 0.0
  %342 = vmatprep.subr.mxu0 0.0
  %343 = vmatpush2.msra.mxu0 0.0
  %344 = vmatprep.subr.mxu0 0.0
  %345 = vmatpush2.msra.mxu0 0.0
  %346 = vmatprep.subr.mxu0 0.0
  %347 = vmatpush2.msra.mxu0 0.0
  %348 = vmatprep.subr.mxu0 0.0
  %349 = vmatpush2.msra.mxu0 0.0
  %350 = vmatprep.subr.mxu0 0.0
  %351 = vmatpush2.msra.mxu0 0.0
  %352 = vmatprep.subr.mxu0 0.0
  %353 = vmatpush2.msra.mxu0 0.0
  %354 = vmatprep.subr.mxu0 0.0
  %355 = vmatpush2.msra.mxu0 0.0
  %356 = vmatprep.subr.mxu0 0.0
  %357 = vmatpush2.msra.mxu0 0.0
  %358 = vmatprep.subr.mxu0 0.0
  %359 = vmatpush2.msra.mxu0 0.0
  %360 = vmatprep.subr.mxu0 0.0
  %361 = vmatpush2.msra.mxu0 0.0
  %362 = vmatprep.mubr.f32.mxu0 0.0
  %363 = vmatmul.mubr.f32.gmra.mxu0 %v296
  %v364 = vpop.f32.mrf.mxu0
  %v365 = vadd.f32 %v294, %v364
  %v366 = vpop.f32.mrf.mxu0
  %367 = vdwg.mxu0
  %368 = vst [vmem:[%s7] sm:$0x1] %v365
  // Predicated region
  $region30: #{critic_forward.1} parent=0 // pred_check
    _
  $region31: #{critic_forward.1} parent=0 // pred_check_branch
    %370 = sbr.rel (0) target = $region33
  $region32: #{critic_forward.1} parent=0 // pred_region
    _
  $region33: #{critic_forward.1} parent=0 // pred_fallthru
    _
  // Predicated region
  $region34: #{critic_forward.1} parent=0 // pred_check
    _
  $region35: #{critic_forward.1} parent=0 // pred_check_branch
    %372 = sbr.rel (0) target = $region37
  $region36: #{critic_forward.1} parent=0 // pred_region
    _
  $region37: #{critic_forward.1} parent=0 // pred_fallthru
    _

</llo_original>
